<compile_context>
chip_gen: v6e
topology: v6e:2x2x1
jax: 0.10.0
libtpu: 0.0.40
codegen_flags: <defaults>
</compile_context>

<pallas_src>
import functools

import jax
import jax.numpy as jnp
from jax.experimental import pallas as pl
from jax.experimental.pallas import tpu as pltpu

_LANES = 128                       # vreg lane width
_ROW_BATCH = _LANES                # batch elements per reshaped row
_C_IN = 2 * _ROW_BATCH             # 256 interleaved (x0, x1) values per row
_SUBLANES = 8
_ROW_ALIGN = _SUBLANES * _ROW_BATCH  # 1024: batch alignment for the free reshape


def _linear_mxu_kernel(w2_ref, b_ref, x_ref, o_ref):
    # w2_ref: (256, 128) f32 expanded weight (W2[2j, j] = w0, W2[2j+1, j] = w1)
    # b_ref:  (1, 128)   f32 bias broadcast row
    # x_ref:  (r_tile, 256) f32 natural-layout rows (128 interleaved pairs each)
    # o_ref:  (r_tile, 128) f32, one y per batch element, lane- & sublane-dense
    o_ref[...] = (
        jnp.dot(x_ref[...], w2_ref[...], preferred_element_type=jnp.float32)
        + b_ref[...]
    )


@functools.partial(jax.jit, static_argnames=("max_tile_rows",))
def linear_regression_forward(x, weight, bias, *, max_tile_rows=8192):
    """Forward of nn.Linear(2, 1): returns x @ weight.T + bias, shape (B, 1).

    x: (B, 2) float32 (PyTorch batch-major layout, consumed as-is)
    weight: (1, 2) float32, bias: (1,) float32.
    """
    orig_dtype = x.dtype
    B, in_f = x.shape
    out_f, in_f_w = weight.shape
    assert in_f == 2 and in_f_w == 2 and out_f == 1 and bias.shape == (1,)

    x = x.astype(jnp.float32)

    # Align the batch so the flat (B, 2) buffer reshapes (free, row-major
    # bitcast) to (rows, 256) with rows a multiple of 8.  Only ragged batches
    # pay an extra pad pass; grid raggedness below is handled by block masking.
    b_pad = pl.cdiv(B, _ROW_ALIGN) * _ROW_ALIGN
    if b_pad != B:
        x = jnp.pad(x, ((0, b_pad - B), (0, 0)))

    rows = b_pad // _ROW_BATCH                 # multiple of 8
    x2d = x.reshape(rows, _C_IN)               # free layout-preserving reshape

    r_tile = min(max_tile_rows, rows)          # multiple of 8 by construction
    nb = pl.cdiv(rows, r_tile)                 # partial last block is masked

    # Expanded weight: (x2d @ W2)[r, j] = x[r*128+j, 0]*w0 + x[r*128+j, 1]*w1.
    w = weight.astype(jnp.float32).reshape(in_f, 1)              # (2, 1)
    w2 = jnp.kron(jnp.eye(_ROW_BATCH, dtype=jnp.float32), w)     # (256, 128)
    b_row = jnp.broadcast_to(
        bias.astype(jnp.float32).reshape(1, 1), (1, _ROW_BATCH))  # (1, 128)

    out2d = pl.pallas_call(
        _linear_mxu_kernel,
        out_shape=jax.ShapeDtypeStruct((rows, _ROW_BATCH), jnp.float32),
        grid_spec=pltpu.PrefetchScalarGridSpec(
            num_scalar_prefetch=0,
            grid=(nb,),
            in_specs=[
                pl.BlockSpec((_C_IN, _ROW_BATCH), lambda i: (0, 0)),   # W2 (stays resident)
                pl.BlockSpec((1, _ROW_BATCH), lambda i: (0, 0)),       # bias row
                pl.BlockSpec((r_tile, _C_IN), lambda i: (i, 0)),       # x rows
            ],
            out_specs=pl.BlockSpec((r_tile, _ROW_BATCH), lambda i: (i, 0)),
        ),
        compiler_params=pltpu.CompilerParams(
            dimension_semantics=("parallel",),          # megacore-shardable batch axis
            vmem_limit_bytes=48 * 1024 * 1024,          # ~24.5 MiB working set + headroom
        ),
        cost_estimate=pl.CostEstimate(
            flops=2 * rows * _C_IN * _ROW_BATCH,
            transcendentals=0,
            bytes_accessed=(rows * _C_IN + rows * _ROW_BATCH + _C_IN * _ROW_BATCH) * 4,
        ),
    )(w2, b_row, x2d)

    # Free reshape back to a flat vector; drop alignment padding (no-op when aligned).
    y = out2d.reshape(b_pad)[:B].reshape(B, 1)
    return y.astype(orig_dtype)


if __name__ == "__main__":
    key = jax.random.PRNGKey(0)
    kx, kw, kb, kx2 = jax.random.split(key, 4)

    # Deterministic parameter init mimicking nn.Linear(2, 1):
    # uniform(-1/sqrt(in_features), 1/sqrt(in_features))
    in_features, out_features = 2, 1
    bound = 1.0 / float(jnp.sqrt(jnp.float32(in_features)))
    weight = jax.random.uniform(
        kw, (out_features, in_features), jnp.float32, -bound, bound)
    bias = jax.random.uniform(
        kb, (out_features,), jnp.float32, -bound, bound)

    # Small batch, like the multivariable linear-regression example data.
    B = 8
    x = jax.random.normal(kx, (B, in_features), jnp.float32)
    y = linear_regression_forward(x, weight, bias)
    jax.block_until_ready(y)

    # Exact elementwise f32 reference (same math as torch's Linear(2, 1)).
    # Tolerance is loose enough to also cover MXU precision modes that use
    # bf16 passes; with the standard multi-pass fp32 matmul the observed
    # error is ~1e-6.
    y_ref = x[:, 0:1] * weight[0, 0] + x[:, 1:2] * weight[0, 1] + bias[0]
    assert y.shape == (B, out_features)
    assert jnp.allclose(y, y_ref, atol=2e-2, rtol=2e-2), \
        float(jnp.max(jnp.abs(y - y_ref)))

    # A second, ragged batch to exercise the alignment-padding path.
    B2 = 1000
    x2 = jax.random.normal(kx2, (B2, in_features), jnp.float32)
    y2 = linear_regression_forward(x2, weight, bias)
    jax.block_until_ready(y2)
    y2_ref = x2[:, 0:1] * weight[0, 0] + x2[:, 1:2] * weight[0, 1] + bias[0]
    assert y2.shape == (B2, out_features)
    assert jnp.allclose(y2, y2_ref, atol=2e-2, rtol=2e-2), \
        float(jnp.max(jnp.abs(y2 - y2_ref)))

    print("KERNEL_OK")
</pallas_src>

<mosaic_0001>
module attributes {stable_mosaic.version = 11 : i64} {
  func.func @_linear_mxu_kernel(%arg0: i32, %arg1: memref<256x128xf32, #tpu.memory_space<vmem>>, %arg2: memref<1x128xf32, #tpu.memory_space<vmem>>, %arg3: memref<8x256xf32, #tpu.memory_space<vmem>>, %arg4: memref<8x128xf32, #tpu.memory_space<vmem>>) attributes {dimension_semantics = [#tpu.dimension_semantics<parallel>], iteration_bounds = array<i64: 1>, scalar_prefetch = 0 : i64, scratch_operands = 0 : i64, tpu.core_type = #tpu.core_type<tc>, window_params = [{pipeline_mode = #tpu.pipeline_mode<synchronous>, transform_indices = @transform_0, window_bounds = array<i64: 256, 128>}, {pipeline_mode = #tpu.pipeline_mode<synchronous>, transform_indices = @transform_1, window_bounds = array<i64: 1, 128>}, {transform_indices = @transform_2, window_bounds = array<i64: 8, 256>}, {transform_indices = @transform_3, window_bounds = array<i64: 8, 128>}]} {
    %c0 = arith.constant 0 : index
    %c0_0 = arith.constant 0 : index
    %0 = vector.load %arg3[%c0, %c0_0] : memref<8x256xf32, #tpu.memory_space<vmem>>, vector<8x256xf32>
    %c0_1 = arith.constant 0 : index
    %c0_2 = arith.constant 0 : index
    %1 = vector.load %arg1[%c0_1, %c0_2] : memref<256x128xf32, #tpu.memory_space<vmem>>, vector<256x128xf32>
    %cst = arith.constant dense<0.000000e+00> : vector<8x128xf32>
    %2 = tpu.matmul %0, %1, %cst {dimension_numbers = #tpu.dot_dimension_numbers<[1], [0], [0], [1], [0, 0, 1, 1], [], []>} : vector<8x256xf32>, vector<256x128xf32>, vector<8x128xf32> -> vector<8x128xf32>
    %c0_3 = arith.constant 0 : index
    %c0_4 = arith.constant 0 : index
    %3 = vector.load %arg2[%c0_3, %c0_4] : memref<1x128xf32, #tpu.memory_space<vmem>>, vector<1x128xf32>
    %4 = vector.broadcast %3 : vector<1x128xf32> to vector<8x128xf32>
    %5 = arith.addf %2, %4 : vector<8x128xf32>
    %c0_5 = arith.constant 0 : index
    %c0_6 = arith.constant 0 : index
    %6 = vector.load %arg4[%c0_5, %c0_6] : memref<8x128xf32, #tpu.memory_space<vmem>>, vector<8x128xf32>
    tpu.vector_store %arg4[%c0_5, %c0_6], %5 {strides = array<i32>} : memref<8x128xf32, #tpu.memory_space<vmem>>, vector<8x128xf32>,
    return
  }
  func.func @transform_0(%arg0: i32) -> (i32, i32) {
    %c0_i32 = arith.constant 0 : i32
    %c0_i32_0 = arith.constant 0 : i32
    %c0_i32_1 = arith.constant 0 : i32
    return %c0_i32, %c0_i32_0 : i32, i32
  }
  func.func @transform_1(%arg0: i32) -> (i32, i32) {
    %c0_i32 = arith.constant 0 : i32
    %c0_i32_0 = arith.constant 0 : i32
    %c0_i32_1 = arith.constant 0 : i32
    return %c0_i32, %c0_i32_0 : i32, i32
  }
  func.func @transform_2(%arg0: i32) -> (i32, i32) {
    %c0_i32 = arith.constant 0 : i32
    %c0_i32_0 = arith.constant 0 : i32
    return %arg0, %c0_i32 : i32, i32
  }
  func.func @transform_3(%arg0: i32) -> (i32, i32) {
    %c0_i32 = arith.constant 0 : i32
    %c0_i32_0 = arith.constant 0 : i32
    return %arg0, %c0_i32 : i32, i32
  }
}

</mosaic_0001>

<llo_original>
// kernel: linear_regression_forward.1
$region0: #{linear_regression_forward.1}
  #allocation0 [shape = 'u32[]', space=smem, size = 0x4, offset = 0x4, fixed_abs, tag = 'smem constant byte address 0x4 - core index']
  #allocation1 [shape = 'u32[144,128]{1,0:T(1,128)}', space=vmem, size = 0x12000, scoped, tag = 'internal scratch']
  %s0 = inlined_call_operand.vmem [shape: f32[256,128], index: 0, kind: input, shape index: {}]
  %s1 = inlined_call_operand.vmem [shape: f32[1,128], index: 1, kind: input, shape index: {}]
  %s2 = inlined_call_operand.vmem [shape: f32[8,256], index: 2, kind: input, shape index: {}]
  %s3 = inlined_call_operand.vmem [shape: f32[8,128], index: 3, kind: output, shape index: {}]
  %s4 = sld [smem:[#allocation0]]
  $region22: #{linear_regression_forward.1} parent=0
    _
  %s6 = ssub.s32 1, %s4
  %s7 = scalar_select 0, %s6, %s4
  // Predicated region
  $region2: #{linear_regression_forward.1} parent=0 // pred_check
    _
  $region3: #{linear_regression_forward.1} parent=0 // pred_check_branch
    %9 = sbr.rel (0) target = $region5
  $region4: #{linear_regression_forward.1} parent=0 // pred_region
    _
  $region5: #{linear_regression_forward.1} parent=0 // pred_fallthru
    _
  // Predicated region
  $region6: #{linear_regression_forward.1} parent=0 // pred_check
    _
  $region7: #{linear_regression_forward.1} parent=0 // pred_check_branch
    %11 = sbr.rel (0) target = $region9
  $region8: #{linear_regression_forward.1} parent=0 // pred_region
    _
  $region9: #{linear_regression_forward.1} parent=0 // pred_fallthru
    _
  // Predicated region
  $region10: #{linear_regression_forward.1} parent=0 // pred_check
    _
  $region11: #{linear_regression_forward.1} parent=0 // pred_check_branch
    %13 = sbr.rel (0) target = $region13
  $region12: #{linear_regression_forward.1} parent=0 // pred_region
    _
  $region13: #{linear_regression_forward.1} parent=0 // pred_fallthru
    _
  %v14 = vld [vmem:[%s2] sm:$0xff]
  %v15 = vld [vmem:[%s2 + $0x8] sm:$0xff]
  %v16 = vld [vmem:[%s0] sm:$0xff]
  %v17 = vld [vmem:[%s0 + $0x8] sm:$0xff]
  %v18 = vld [vmem:[%s0 + $0x10] sm:$0xff]
  %v19 = vld [vmem:[%s0 + $0x18] sm:$0xff]
  %v20 = vld [vmem:[%s0 + $0x20] sm:$0xff]
  %v21 = vld [vmem:[%s0 + $0x28] sm:$0xff]
  %v22 = vld [vmem:[%s0 + $0x30] sm:$0xff]
  %v23 = vld [vmem:[%s0 + $0x38] sm:$0xff]
  %v24 = vld [vmem:[%s0 + $0x40] sm:$0xff]
  %v25 = vld [vmem:[%s0 + $0x48] sm:$0xff]
  %v26 = vld [vmem:[%s0 + $0x50] sm:$0xff]
  %v27 = vld [vmem:[%s0 + $0x58] sm:$0xff]
  %v28 = vld [vmem:[%s0 + $0x60] sm:$0xff]
  %v29 = vld [vmem:[%s0 + $0x68] sm:$0xff]
  %v30 = vld [vmem:[%s0 + $0x70] sm:$0xff]
  %v31 = vld [vmem:[%s0 + $0x78] sm:$0xff]
  %v32 = vld [vmem:[%s0 + $0x80] sm:$0xff]
  %v33 = vld [vmem:[%s0 + $0x88] sm:$0xff]
  %v34 = vld [vmem:[%s0 + $0x90] sm:$0xff]
  %v35 = vld [vmem:[%s0 + $0x98] sm:$0xff]
  %v36 = vld [vmem:[%s0 + $0xa0] sm:$0xff]
  %v37 = vld [vmem:[%s0 + $0xa8] sm:$0xff]
  %v38 = vld [vmem:[%s0 + $0xb0] sm:$0xff]
  %v39 = vld [vmem:[%s0 + $0xb8] sm:$0xff]
  %v40 = vld [vmem:[%s0 + $0xc0] sm:$0xff]
  %v41 = vld [vmem:[%s0 + $0xc8] sm:$0xff]
  %v42 = vld [vmem:[%s0 + $0xd0] sm:$0xff]
  %v43 = vld [vmem:[%s0 + $0xd8] sm:$0xff]
  %v44 = vld [vmem:[%s0 + $0xe0] sm:$0xff]
  %v45 = vld [vmem:[%s0 + $0xe8] sm:$0xff]
  %v46 = vld [vmem:[%s0 + $0xf0] sm:$0xff]
  %v47 = vld [vmem:[%s0 + $0xf8] sm:$0xff]
  %v48 = vld [vmem:[%s1] sm:$0x1]
  %v50 = vlaneseq
  %v51 = vshrl.u32 %v50, 7
  %v52 = vsub.s32 0, %v51
  %v53 = vrot.slane %v48, %v52
  %55 = vmatprep.subr.mxu0 0.0
  %56 = vmatpush1.msra.mxu0 %v31
  %57 = vmatprep.subr.mxu0 0.0
  %58 = vmatpush1.msra.mxu0 %v30
  %59 = vmatprep.subr.mxu0 0.0
  %60 = vmatpush1.msra.mxu0 %v29
  %61 = vmatprep.subr.mxu0 0.0
  %62 = vmatpush1.msra.mxu0 %v28
  %63 = vmatprep.subr.mxu0 0.0
  %64 = vmatpush1.msra.mxu0 %v27
  %65 = vmatprep.subr.mxu0 0.0
  %66 = vmatpush1.msra.mxu0 %v26
  %67 = vmatprep.subr.mxu0 0.0
  %68 = vmatpush1.msra.mxu0 %v25
  %69 = vmatprep.subr.mxu0 0.0
  %70 = vmatpush1.msra.mxu0 %v24
  %71 = vmatprep.subr.mxu0 0.0
  %72 = vmatpush1.msra.mxu0 %v23
  %73 = vmatprep.subr.mxu0 0.0
  %74 = vmatpush1.msra.mxu0 %v22
  %75 = vmatprep.subr.mxu0 0.0
  %76 = vmatpush1.msra.mxu0 %v21
  %77 = vmatprep.subr.mxu0 0.0
  %78 = vmatpush1.msra.mxu0 %v20
  %79 = vmatprep.subr.mxu0 0.0
  %80 = vmatpush1.msra.mxu0 %v19
  %81 = vmatprep.subr.mxu0 0.0
  %82 = vmatpush1.msra.mxu0 %v18
  %83 = vmatprep.subr.mxu0 0.0
  %84 = vmatpush1.msra.mxu0 %v17
  %85 = vmatprep.subr.mxu0 0.0
  %86 = vmatpush1.msra.mxu0 %v16
  %87 = vmatprep.subr.mxu0 0.0
  %88 = vmatpush2.msra.mxu0 %v47
  %89 = vmatprep.subr.mxu0 0.0
  %90 = vmatpush2.msra.mxu0 %v46
  %91 = vmatprep.subr.mxu0 0.0
  %92 = vmatpush2.msra.mxu0 %v45
  %93 = vmatprep.subr.mxu0 0.0
  %94 = vmatpush2.msra.mxu0 %v44
  %95 = vmatprep.subr.mxu0 0.0
  %96 = vmatpush2.msra.mxu0 %v43
  %97 = vmatprep.subr.mxu0 0.0
  %98 = vmatpush2.msra.mxu0 %v42
  %99 = vmatprep.subr.mxu0 0.0
  %100 = vmatpush2.msra.mxu0 %v41
  %101 = vmatprep.subr.mxu0 0.0
  %102 = vmatpush2.msra.mxu0 %v40
  %103 = vmatprep.subr.mxu0 0.0
  %104 = vmatpush2.msra.mxu0 %v39
  %105 = vmatprep.subr.mxu0 0.0
  %106 = vmatpush2.msra.mxu0 %v38
  %107 = vmatprep.subr.mxu0 0.0
  %108 = vmatpush2.msra.mxu0 %v37
  %109 = vmatprep.subr.mxu0 0.0
  %110 = vmatpush2.msra.mxu0 %v36
  %111 = vmatprep.subr.mxu0 0.0
  %112 = vmatpush2.msra.mxu0 %v35
  %113 = vmatprep.subr.mxu0 0.0
  %114 = vmatpush2.msra.mxu0 %v34
  %115 = vmatprep.subr.mxu0 0.0
  %116 = vmatpush2.msra.mxu0 %v33
  %117 = vmatprep.subr.mxu0 0.0
  %118 = vmatpush2.msra.mxu0 %v32
  %119 = vmatprep.mubr.f32.mxu0 %v15
  %120 = vmatmul.mubr.f32.gmra.mxu0 %v14
  %v121 = vpop.f32.mrf.mxu0
  %v122 = vadd.f32 %v53, %v121
  %v123 = vpop.f32.mrf.mxu0
  %124 = vdwg.mxu0
  %125 = vst [vmem:[%s3] sm:$0xff] %v122
  // Predicated region
  $region14: #{linear_regression_forward.1} parent=0 // pred_check
    _
  $region15: #{linear_regression_forward.1} parent=0 // pred_check_branch
    %127 = sbr.rel (0) target = $region17
  $region16: #{linear_regression_forward.1} parent=0 // pred_region
    _
  $region17: #{linear_regression_forward.1} parent=0 // pred_fallthru
    _
  // Predicated region
  $region18: #{linear_regression_forward.1} parent=0 // pred_check
    _
  $region19: #{linear_regression_forward.1} parent=0 // pred_check_branch
    %129 = sbr.rel (0) target = $region21
  $region20: #{linear_regression_forward.1} parent=0 // pred_region
    _
  $region21: #{linear_regression_forward.1} parent=0 // pred_fallthru
    _

</llo_original>
